<compile_context>
chip_gen: v6e
topology: v6e:2x2x1
jax: 0.10.0
libtpu: 0.0.40
codegen_flags: <defaults>
</compile_context>

<pallas_src>
import jax
import jax.numpy as jnp
from jax.experimental import pallas as pl
from jax.experimental.pallas import tpu as pltpu

_LANE = 128
_MAX_COLS = 2048                      # lane-dense output slab (multiple of 128)
_TILE_BYTES = 2 * 1024 * 1024         # ~2 MiB per tile


def _sublane(dtype) -> int:
    # Native second-minor tile per dtype width (32-bit: 8, 16-bit: 16, 8-bit: 32).
    return {4: 8, 2: 16, 1: 32}.get(jnp.dtype(dtype).itemsize, 8)


def _identity_kernel(x_ref, o_ref):
    # Pure pass-through of the current VMEM tile.
    o_ref[...] = x_ref[...]


def _identity_impl(x):
    orig_shape = x.shape
    dtype = x.dtype

    flat = x.reshape(-1)
    n = flat.shape[0]
    if n == 0:
        # Degenerate empty tensor: nothing to copy.
        return flat.reshape(orig_shape)

    # Lane-dense width: largest power-of-two multiple of 128 (<= _MAX_COLS)
    # not exceeding n; tiny inputs fall back to 128 and get padded up.
    cols = _LANE
    c = _MAX_COLS
    while c >= _LANE:
        if n >= c:
            cols = c
            break
        c //= 2

    rows = pl.cdiv(n, cols)
    padded = rows * cols
    if padded != n:
        flat = jnp.pad(flat, (0, padded - n))
    x2d = flat.reshape(rows, cols)

    # Row-block: dtype-native sublane multiple, capped at ~2 MiB per tile.
    sub = _sublane(dtype)
    itemsize = jnp.dtype(dtype).itemsize
    max_rows = max(sub, _TILE_BYTES // (cols * itemsize))
    tr = min(rows, max_rows)
    if tr >= sub:
        tr = (tr // sub) * sub        # align to the dtype's native sublane tile
    else:
        tr = rows                     # tiny input: single full-extent block

    grid = (pl.cdiv(rows, tr),)

    out2d = pl.pallas_call(
        _identity_kernel,
        out_shape=jax.ShapeDtypeStruct((rows, cols), dtype),
        grid=grid,
        in_specs=[pl.BlockSpec((tr, cols), lambda i: (i, 0))],
        out_specs=pl.BlockSpec((tr, cols), lambda i: (i, 0)),
        input_output_aliases={0: 0},   # let XLA reuse the input buffer
        compiler_params=pltpu.CompilerParams(
            dimension_semantics=("parallel",),
            vmem_limit_bytes=32 * 1024 * 1024,
        ),
    )(x2d)

    out_flat = out2d.reshape(-1)
    if padded != n:
        out_flat = out_flat[:n]
    return out_flat.reshape(orig_shape)


# jit so the flatten/pad/reshape plumbing fuses around the single pallas_call.
identity = jax.jit(_identity_impl)


if __name__ == "__main__":
    key = jax.random.PRNGKey(0)
    # Small NCHW input consistent with a CIFAR-style module: (2, 4, 16, 16)
    x = jax.random.normal(key, (2, 4, 16, 16), dtype=jnp.float32)

    y = identity(x)
    jax.block_until_ready(y)

    assert y.shape == x.shape and y.dtype == x.dtype
    assert bool(jnp.all(y == x))
    print("KERNEL_OK")
</pallas_src>

<mosaic_0001>
module attributes {stable_mosaic.version = 11 : i64} {
  func.func @_identity_kernel(%arg0: i32, %arg1: memref<1x2048xf32, #tpu.memory_space<vmem>>, %arg2: memref<1x2048xf32, #tpu.memory_space<vmem>>) attributes {dimension_semantics = [#tpu.dimension_semantics<parallel>], iteration_bounds = array<i64: 1>, scalar_prefetch = 0 : i64, scratch_operands = 0 : i64, tpu.core_type = #tpu.core_type<tc>, window_params = [{transform_indices = @transform_0, window_bounds = array<i64: 1, 2048>}, {transform_indices = @transform_1, window_bounds = array<i64: 1, 2048>}]} {
    %c0 = arith.constant 0 : index
    %c0_0 = arith.constant 0 : index
    %0 = vector.load %arg1[%c0, %c0_0] : memref<1x2048xf32, #tpu.memory_space<vmem>>, vector<1x2048xf32>
    %c0_1 = arith.constant 0 : index
    %c0_2 = arith.constant 0 : index
    %1 = vector.load %arg2[%c0_1, %c0_2] : memref<1x2048xf32, #tpu.memory_space<vmem>>, vector<1x2048xf32>
    tpu.vector_store %arg2[%c0_1, %c0_2], %0 {strides = array<i32>} : memref<1x2048xf32, #tpu.memory_space<vmem>>, vector<1x2048xf32>,
    return
  }
  func.func @transform_0(%arg0: i32) -> (i32, i32) {
    %c0_i32 = arith.constant 0 : i32
    %c0_i32_0 = arith.constant 0 : i32
    return %arg0, %c0_i32 : i32, i32
  }
  func.func @transform_1(%arg0: i32) -> (i32, i32) {
    %c0_i32 = arith.constant 0 : i32
    %c0_i32_0 = arith.constant 0 : i32
    return %arg0, %c0_i32 : i32, i32
  }
}

</mosaic_0001>

<llo_original>
// kernel: _identity_impl.1
$region0: #{_identity_impl.1}
  #allocation0 [shape = 'u32[]', space=smem, size = 0x4, offset = 0x4, fixed_abs, tag = 'smem constant byte address 0x4 - core index']
  #allocation1 [shape = 'u32[144,128]{1,0:T(1,128)}', space=vmem, size = 0x12000, scoped, tag = 'internal scratch']
  %s0 = inlined_call_operand.vmem [shape: f32[1,2048], index: 0, kind: input, shape index: {}, may-alias: {0,1}]
  %s1 = inlined_call_operand.vmem [shape: f32[1,2048], index: 1, kind: output, shape index: {}, may-alias: {0,1}]
  %s2 = sld [smem:[#allocation0]]
  $region14: #{_identity_impl.1} parent=0
    _
  %s4 = ssub.s32 1, %s2
  %s5 = scalar_select 0, %s4, %s2
  // Predicated region
  $region2: #{_identity_impl.1} parent=0 // pred_check
    _
  $region3: #{_identity_impl.1} parent=0 // pred_check_branch
    %7 = sbr.rel (0) target = $region5
  $region4: #{_identity_impl.1} parent=0 // pred_region
    _
  $region5: #{_identity_impl.1} parent=0 // pred_fallthru
    _
  %v8 = vld [vmem:[%s0] sm:$0xff]
  %v9 = vld [vmem:[%s0 + $0x8] sm:$0xff]
  %10 = vst [vmem:[%s1] sm:$0xff] %v8
  %11 = vst [vmem:[%s1 + $0x8] sm:$0xff] %v9
  // Predicated region
  $region6: #{_identity_impl.1} parent=0 // pred_check
    _
  $region7: #{_identity_impl.1} parent=0 // pred_check_branch
    %13 = sbr.rel (0) target = $region9
  $region8: #{_identity_impl.1} parent=0 // pred_region
    _
  $region9: #{_identity_impl.1} parent=0 // pred_fallthru
    _
  // Predicated region
  $region10: #{_identity_impl.1} parent=0 // pred_check
    _
  $region11: #{_identity_impl.1} parent=0 // pred_check_branch
    %15 = sbr.rel (0) target = $region13
  $region12: #{_identity_impl.1} parent=0 // pred_region
    _
  $region13: #{_identity_impl.1} parent=0 // pred_fallthru
    _

</llo_original>
